<compile_context>
chip_gen: v7x
topology: tpu7x:2x2x1
jax: 0.10.0
libtpu: 0.0.40
codegen_flags: <defaults>
</compile_context>

<pallas_src>
import jax
import jax.numpy as jnp
from jax.experimental import pallas as pl
from jax.experimental.pallas import tpu as pltpu


_LANES = 128            # vreg lane width
_SUBLANES = 8           # f32 vreg sublane height
_CHAIN_MAX_TYPES = 16   # <= this: compare/select chain; above: bit-select tree


def _gather_from_table(idx, p_ref, num_types):
    """out = p_tab[idx], with p_tab[0] == 0 and idx outside [0, num_types) -> 0.

    idx   : (tr, cols) int32 tile
    p_ref : (num_types,) f32 SMEM table (p_ref[0] must already be 0.0)
    """
    if num_types <= _CHAIN_MAX_TYPES:
        # Classes are mutually exclusive -> select straight into the accumulator;
        # idx == 0 ("no dependency") and out-of-range ids stay at 0.0.
        acc = jnp.zeros(idx.shape, jnp.float32)
        for n in range(1, num_types):
            acc = jnp.where(idx == n, p_ref[n], acc)
        return acc

    # Bit-decomposition select tree: (num_types-1) selects + log2(N) bit tests
    # instead of 2*(num_types-1) VALU ops for the plain chain.
    num_bits = (num_types - 1).bit_length()
    width = 1 << num_bits
    vals = [p_ref[n] if n < num_types else 0.0 for n in range(width)]
    for level in range(num_bits):
        bit = (idx & 1) if level == 0 else ((idx >> level) & 1)
        take_hi = bit != 0
        vals = [jnp.where(take_hi, vals[2 * i + 1], vals[2 * i])
                for i in range(len(vals) // 2)]
    # Preserve the "out-of-range -> 0.0" behaviour of the chain path.
    in_range = (idx >= 0) & (idx < num_types)
    return jnp.where(in_range, vals[0], 0.0)


def _make_dep_gather_kernel(num_types):
    def kernel(p_ref, idx_ref, o_ref):
        o_ref[...] = _gather_from_table(idx_ref[...], p_ref, num_types)
    return kernel


def dep_type_forward(x, w, b, syn_dep_adj, overall_max_len, batch_size,
                     *, block_bytes=2 * 1024 * 1024):
    """x: (N, D) f32, w: (D, 1) f32, b: (1, 1) or (1,) f32,
    syn_dep_adj: (B, L, L) integer adjacency of dep-type ids."""
    num_types, _ = x.shape
    B, L, L2 = syn_dep_adj.shape
    assert L == L2 and B == batch_size and L == overall_max_len

    # --- tiny projection + softmax (N scalars; negligible, plain jnp) -------
    scores = (x @ w).reshape(-1) + jnp.reshape(b, (-1,))[0]
    p = jax.nn.softmax(scores.astype(jnp.float32))
    p_tab = p.at[0].set(0.0)          # dep-type 0 == "no dependency" -> 0.0

    # --- copy-free 2-D view of syn_dep_adj (no pad, no output slice) --------
    if syn_dep_adj.dtype != jnp.int32:
        syn_dep_adj = syn_dep_adj.astype(jnp.int32)
    total = B * L * L
    if total % _LANES == 0:
        rows, cols = total // _LANES, _LANES      # perfectly lane-dense
    else:
        rows, cols = B * L, L                     # still a free reshape
    idx2d = syn_dep_adj.reshape(rows, cols)

    # --- row tiling: ~block_bytes per operand per buffer, >= 2 grid steps ---
    def _round_up(v, m):
        return ((v + m - 1) // m) * m

    if rows <= _SUBLANES:
        tr = rows                                 # full-dim block
    else:
        budget_rows = max(_SUBLANES,
                          (block_bytes // (cols * 4)) // _SUBLANES * _SUBLANES)
        half_rows = _round_up(pl.cdiv(rows, 2), _SUBLANES)   # v7x: use both TCs
        tr = max(_SUBLANES, min(budget_rows, half_rows))
    grid_rows = pl.cdiv(rows, tr)

    kernel = _make_dep_gather_kernel(num_types)

    out2d = pl.pallas_call(
        kernel,
        out_shape=jax.ShapeDtypeStruct((rows, cols), jnp.float32),
        grid=(grid_rows,),
        in_specs=[
            # Softmax table: whole array, resident in SMEM (cheap scalar reads).
            pl.BlockSpec(memory_space=pltpu.MemorySpace.SMEM),
            pl.BlockSpec((tr, cols), lambda i: (i, 0)),       # idx tile
        ],
        out_specs=pl.BlockSpec((tr, cols), lambda i: (i, 0)),
        compiler_params=pltpu.CompilerParams(
            dimension_semantics=("parallel",),    # v7x: shard rows on 2 TCs
            vmem_limit_bytes=32 * 1024 * 1024),
        cost_estimate=pl.CostEstimate(
            flops=2 * total * max(num_types - 1, 1),
            transcendentals=0,
            bytes_accessed=2 * total * 4 + num_types * 4),
    )(p_tab, idx2d)

    return out2d.reshape(B, L, L)


def dep_type_reference(x, w, b, syn_dep_adj):
    s = (x @ w + jnp.reshape(b, (1, 1))).reshape(-1)
    p = jax.nn.softmax(s)
    out = p[syn_dep_adj]
    return jnp.where(syn_dep_adj == 0, 0.0, out)


if __name__ == "__main__":
    key = jax.random.PRNGKey(0)
    k_x, k_w, k_b, k_adj = jax.random.split(key, 4)

    # Small, forward-consistent shapes.
    num_dep_types = 8       # N  (rows of `input`, softmax axis)
    att_dim = 32            # D
    batch_size = 2          # B
    overall_max_len = 16    # L

    x = jax.random.normal(k_x, (num_dep_types, att_dim), dtype=jnp.float32)
    # nn.Linear(att_dim, 1): weight (1, att_dim), bias (1,). Stored transposed.
    w = (jax.random.normal(k_w, (att_dim, 1), dtype=jnp.float32)
         / jnp.sqrt(att_dim))
    b = jax.random.normal(k_b, (1, 1), dtype=jnp.float32) * 0.1
    syn_dep_adj = jax.random.randint(
        k_adj, (batch_size, overall_max_len, overall_max_len),
        0, num_dep_types, dtype=jnp.int32)

    out = dep_type_forward(x, w, b, syn_dep_adj, overall_max_len, batch_size)
    out = jax.block_until_ready(out)

    ref = dep_type_reference(x, w, b, syn_dep_adj)
    assert out.shape == (batch_size, overall_max_len, overall_max_len)
    assert jnp.allclose(out, ref, atol=1e-5, rtol=1e-5), "mismatch vs reference"

    print("KERNEL_OK")
</pallas_src>

<mosaic_0001>
module attributes {stable_mosaic.version = 11 : i64} {
  func.func @kernel(%arg0: i32, %arg1: memref<8xf32, #tpu.memory_space<smem>>, %arg2: memref<4x128xi32, #tpu.memory_space<vmem>>, %arg3: memref<4x128xf32, #tpu.memory_space<vmem>>) attributes {dimension_semantics = [#tpu.dimension_semantics<parallel>], iteration_bounds = array<i64: 1>, scalar_prefetch = 0 : i64, scratch_operands = 0 : i64, tpu.core_type = #tpu.core_type<tc>, window_params = [{transform_indices = @transform_0, window_bounds = array<i64: 8>}, {transform_indices = @transform_1, window_bounds = array<i64: 4, 128>}, {transform_indices = @transform_2, window_bounds = array<i64: 4, 128>}]} {
    %c0 = arith.constant 0 : index
    %c0_0 = arith.constant 0 : index
    %0 = vector.load %arg2[%c0, %c0_0] : memref<4x128xi32, #tpu.memory_space<vmem>>, vector<4x128xi32>
    %cst = arith.constant 0.000000e+00 : f32
    %1 = vector.broadcast %cst : f32 to vector<4x128xf32>
    %c1_i32 = arith.constant 1 : i32
    %2 = vector.broadcast %c1_i32 : i32 to vector<4x128xi32>
    %3 = arith.cmpi eq, %0, %2 : vector<4x128xi32>
    %c1 = arith.constant 1 : index
    %4 = memref.load %arg1[%c1] : memref<8xf32, #tpu.memory_space<smem>>
    %5 = vector.broadcast %4 : f32 to vector<4x128xf32>
    %6 = arith.select %3, %5, %1 : vector<4x128xi1>, vector<4x128xf32>
    %c2_i32 = arith.constant 2 : i32
    %7 = vector.broadcast %c2_i32 : i32 to vector<4x128xi32>
    %8 = arith.cmpi eq, %0, %7 : vector<4x128xi32>
    %c2 = arith.constant 2 : index
    %9 = memref.load %arg1[%c2] : memref<8xf32, #tpu.memory_space<smem>>
    %10 = vector.broadcast %9 : f32 to vector<4x128xf32>
    %11 = arith.select %8, %10, %6 : vector<4x128xi1>, vector<4x128xf32>
    %c3_i32 = arith.constant 3 : i32
    %12 = vector.broadcast %c3_i32 : i32 to vector<4x128xi32>
    %13 = arith.cmpi eq, %0, %12 : vector<4x128xi32>
    %c3 = arith.constant 3 : index
    %14 = memref.load %arg1[%c3] : memref<8xf32, #tpu.memory_space<smem>>
    %15 = vector.broadcast %14 : f32 to vector<4x128xf32>
    %16 = arith.select %13, %15, %11 : vector<4x128xi1>, vector<4x128xf32>
    %c4_i32 = arith.constant 4 : i32
    %17 = vector.broadcast %c4_i32 : i32 to vector<4x128xi32>
    %18 = arith.cmpi eq, %0, %17 : vector<4x128xi32>
    %c4 = arith.constant 4 : index
    %19 = memref.load %arg1[%c4] : memref<8xf32, #tpu.memory_space<smem>>
    %20 = vector.broadcast %19 : f32 to vector<4x128xf32>
    %21 = arith.select %18, %20, %16 : vector<4x128xi1>, vector<4x128xf32>
    %c5_i32 = arith.constant 5 : i32
    %22 = vector.broadcast %c5_i32 : i32 to vector<4x128xi32>
    %23 = arith.cmpi eq, %0, %22 : vector<4x128xi32>
    %c5 = arith.constant 5 : index
    %24 = memref.load %arg1[%c5] : memref<8xf32, #tpu.memory_space<smem>>
    %25 = vector.broadcast %24 : f32 to vector<4x128xf32>
    %26 = arith.select %23, %25, %21 : vector<4x128xi1>, vector<4x128xf32>
    %c6_i32 = arith.constant 6 : i32
    %27 = vector.broadcast %c6_i32 : i32 to vector<4x128xi32>
    %28 = arith.cmpi eq, %0, %27 : vector<4x128xi32>
    %c6 = arith.constant 6 : index
    %29 = memref.load %arg1[%c6] : memref<8xf32, #tpu.memory_space<smem>>
    %30 = vector.broadcast %29 : f32 to vector<4x128xf32>
    %31 = arith.select %28, %30, %26 : vector<4x128xi1>, vector<4x128xf32>
    %c7_i32 = arith.constant 7 : i32
    %32 = vector.broadcast %c7_i32 : i32 to vector<4x128xi32>
    %33 = arith.cmpi eq, %0, %32 : vector<4x128xi32>
    %c7 = arith.constant 7 : index
    %34 = memref.load %arg1[%c7] : memref<8xf32, #tpu.memory_space<smem>>
    %35 = vector.broadcast %34 : f32 to vector<4x128xf32>
    %36 = arith.select %33, %35, %31 : vector<4x128xi1>, vector<4x128xf32>
    %c0_1 = arith.constant 0 : index
    %c0_2 = arith.constant 0 : index
    %37 = vector.load %arg3[%c0_1, %c0_2] : memref<4x128xf32, #tpu.memory_space<vmem>>, vector<4x128xf32>
    tpu.vector_store %arg3[%c0_1, %c0_2], %36 {strides = array<i32>} : memref<4x128xf32, #tpu.memory_space<vmem>>, vector<4x128xf32>,
    return
  }
  func.func @transform_0(%arg0: i32) -> i32 {
    %c0_i32 = arith.constant 0 : i32
    %c0_i32_0 = arith.constant 0 : i32
    return %c0_i32 : i32
  }
  func.func @transform_1(%arg0: i32) -> (i32, i32) {
    %c0_i32 = arith.constant 0 : i32
    %c0_i32_0 = arith.constant 0 : i32
    return %arg0, %c0_i32 : i32, i32
  }
  func.func @transform_2(%arg0: i32) -> (i32, i32) {
    %c0_i32 = arith.constant 0 : i32
    %c0_i32_0 = arith.constant 0 : i32
    return %arg0, %c0_i32 : i32, i32
  }
}

</mosaic_0001>

<llo_original>
// kernel: tpu_custom_call.1
$region0: #{tpu_custom_call.1}
  #allocation0 [shape = 'u32[]', space=smem, size = 0x4, offset = 0x4, fixed_abs, tag = 'smem constant byte address 0x4 - core index']
  #allocation1 [shape = 'u32[144,128]{1,0:T(1,128)}', space=vmem, size = 0x12000, scoped, tag = 'internal scratch']
  %s0 = inlined_call_operand.hbm [shape: f32[8], index: 0, kind: input, shape index: {}]
  %s1 = inlined_call_operand.hbm [shape: s32[4,128], index: 1, kind: input, shape index: {}]
  %s2 = inlined_call_operand.hbm [shape: f32[4,128], index: 2, kind: output, shape index: {}]
  %s3 = sld [smem:[#allocation0]]
  $region26: #{tpu_custom_call.1} parent=0
    _
  %s5 = ssub.s32 1, %s3
  %s6 = scalar_select 0, %s5, %s3
  $region1: #{tpu_custom_call.1} parent=0
    #allocation2 [shape = 'u8[512]{0}', space=smem, size = 0x200, scoped, tag = 'input window, operand 0, single buffered']
    #allocation3 [shape = 's32[1]{0}', space=sflag, size = 0x4, scoped, tag = 'scoped memory for tpu_custom_call.1']
    #allocation4 [shape = 's32[1]{0}', space=sflag, size = 0x4, scoped, tag = 'scoped memory for tpu_custom_call.1']
    #allocation5 [shape = 's32[1]{0}', space=sflag, size = 0x4, scoped, tag = 'scoped memory for tpu_custom_call.1']
    #allocation6 [shape = 'u8[2048]{0}', space=vmem, size = 0x800, scoped, tag = 'input window, operand 1, single buffered']
    #allocation7 [shape = 'u8[2048]{0}', space=vmem, size = 0x800, scoped, tag = 'output window, operand 0, single buffered']
    %7 = vsyncpa [#allocation5], 0
    %8 = vsyncpa [#allocation3], 0
    %9 = vsyncpa [#allocation4], 0
    // Predicated region
    $region2: #{tpu_custom_call.1} parent=1 // pred_check
      _
    $region3: #{tpu_custom_call.1} parent=1 // pred_check_branch
      %11 = sbr.rel (0) target = $region5
    $region4: #{tpu_custom_call.1} parent=1 // pred_region
      %s13 = ssub.s32 16, 16
      %14 = vsyncadd [#allocation5], %s13
      %17 = dma.hbm_to_smem %s0, 16, [#allocation2], [#allocation5]
    $region5: #{tpu_custom_call.1} parent=1 // pred_fallthru
      _
    // Predicated region
    $region6: #{tpu_custom_call.1} parent=1 // pred_check
      _
    $region7: #{tpu_custom_call.1} parent=1 // pred_check_branch
      %19 = sbr.rel (0) target = $region9
    $region8: #{tpu_custom_call.1} parent=1 // pred_region
      %s21 = ssub.s32 64, 64
      %22 = vsyncadd [#allocation3], %s21
      %s24 = sshll.u32 [#allocation6], 4
      %s25 = int_to_ptr.vmem [resolvable:$true] %s24
      %27 = dma.hbm_to_vmem [thread:$0]  %s1, 64, %s25, [#allocation3]
    $region9: #{tpu_custom_call.1} parent=1 // pred_fallthru
      _
    // Predicated region
    $region10: #{tpu_custom_call.1} parent=1 // pred_check
      _
    $region11: #{tpu_custom_call.1} parent=1 // pred_check_branch
      %29 = sbr.rel (0) target = $region13
    $region12: #{tpu_custom_call.1} parent=1 // pred_region
      %30 = dma.done [#allocation5], 16
    $region13: #{tpu_custom_call.1} parent=1 // pred_fallthru
      _
    // Predicated region
    $region14: #{tpu_custom_call.1} parent=1 // pred_check
      _
    $region15: #{tpu_custom_call.1} parent=1 // pred_check_branch
      %32 = sbr.rel (0) target = $region17
    $region16: #{tpu_custom_call.1} parent=1 // pred_region
      %33 = dma.done [#allocation3], 64
    $region17: #{tpu_custom_call.1} parent=1 // pred_fallthru
      _
    %34 = sfence
    %v35 = vld [vmem:[#allocation6] sm:$0xf]
    %vm36 = vcmp.eq.s32.totalorder %v35, 1
    %s37 = sld [smem:[#allocation2 + $0x1]]
    %v38 = vstv %s37
    %v39 = vsel %vm36, %v38, 0.0
    %vm40 = vcmp.eq.s32.totalorder %v35, 2
    %s41 = sld [smem:[#allocation2 + $0x2]]
    %v42 = vstv %s41
    %v43 = vsel %vm40, %v42, %v39
    %vm44 = vcmp.eq.s32.totalorder %v35, 3
    %s45 = sld [smem:[#allocation2 + $0x3]]
    %v46 = vstv %s45
    %v47 = vsel %vm44, %v46, %v43
    %vm48 = vcmp.eq.s32.totalorder %v35, 4
    %s49 = sld [smem:[#allocation2 + $0x4]]
    %v50 = vstv %s49
    %v51 = vsel %vm48, %v50, %v47
    %vm52 = vcmp.eq.s32.totalorder %v35, 5
    %s53 = sld [smem:[#allocation2 + $0x5]]
    %v54 = vstv %s53
    %v55 = vsel %vm52, %v54, %v51
    %vm56 = vcmp.eq.s32.totalorder %v35, 6
    %s57 = sld [smem:[#allocation2 + $0x6]]
    %v58 = vstv %s57
    %v59 = vsel %vm56, %v58, %v55
    %vm60 = vcmp.eq.s32.totalorder %v35, 7
    %s61 = sld [smem:[#allocation2 + $0x7]]
    %v62 = vstv %s61
    %v63 = vsel %vm60, %v62, %v59
    %64 = vst [vmem:[#allocation7] sm:$0xf] %v63
    // Predicated region
    $region18: #{tpu_custom_call.1} parent=1 // pred_check
      _
    $region19: #{tpu_custom_call.1} parent=1 // pred_check_branch
      %66 = sbr.rel (0) target = $region21
    $region20: #{tpu_custom_call.1} parent=1 // pred_region
      %s68 = ssub.s32 64, 64
      %69 = vsyncadd [#allocation4], %s68
      %s71 = sshll.u32 [#allocation7], 4
      %s72 = int_to_ptr.vmem [resolvable:$true] %s71
      %74 = dma.vmem_to_hbm [thread:$0]  %s72, 64, %s2, [#allocation4]
    $region21: #{tpu_custom_call.1} parent=1 // pred_fallthru
      _
    // Predicated region
    $region22: #{tpu_custom_call.1} parent=1 // pred_check
      _
    $region23: #{tpu_custom_call.1} parent=1 // pred_check_branch
      %76 = sbr.rel (0) target = $region25
    $region24: #{tpu_custom_call.1} parent=1 // pred_region
      %77 = dma.done [#allocation4], 64
    $region25: #{tpu_custom_call.1} parent=1 // pred_fallthru
      _
    %78 = vsyncpa [#allocation3], 1
    %79 = vsyncpa [#allocation4], 1
    %80 = vsyncpa [#allocation5], 1

</llo_original>
